<compile_context>
chip_gen: v7x
topology: tpu7x:2x2x1
jax: 0.10.0
libtpu: 0.0.40
codegen_flags: <defaults>
</compile_context>

<pallas_src>
import functools

import jax
import jax.numpy as jnp
from jax.experimental import pallas as pl
from jax.experimental.pallas import tpu as pltpu


_HIDDEN = 8            # both hidden layers are fixed at 8 in the module
_PACK_ROWS = 24        # 8 (layer1) + 8 (layer2) + 8 (layer3, padded) sublane rows
_PACK_LANES = 128      # one full lane group


def _mlp_kernel(p_ref, xt_ref, ot_ref, *, input_dims, actions, bias_col):
    """Fused 3-layer MLP on one batch tile.

    p_ref : (24, 128)         packed weights/biases (resident across tiles)
    xt_ref: (input_dims, TB)  observations, feature-major (batch on lanes)
    ot_ref: (actions, TB)     logits, feature-major
    """
    p = p_ref[...]
    xt = xt_ref[...]
    tb = xt.shape[1]

    def fma_layer(w_t, b_col, a):
        # w_t: (N, K), b_col: (N, 1), a: (K, TB)  ->  (N, TB)
        n, k_dim = w_t.shape
        acc = jnp.broadcast_to(b_col, (n, tb)).astype(jnp.float32)
        for k in range(k_dim):                       # statically unrolled, K <= 8
            acc = acc + w_t[:, k:k + 1] * a[k:k + 1, :]
        return acc

    w1_t = p[0:8, 0:input_dims]                      # (8, input_dims)
    b1 = p[0:8, bias_col:bias_col + 1]               # (8, 1)
    w2_t = p[8:16, 0:_HIDDEN]                        # (8, 8)
    b2 = p[8:16, bias_col:bias_col + 1]
    w3_t = p[16:16 + actions, 0:_HIDDEN]             # (actions, 8)
    b3 = p[16:16 + actions, bias_col:bias_col + 1]

    h = jnp.maximum(fma_layer(w1_t, b1, xt), 0.0)    # (8, TB)
    h = jnp.maximum(fma_layer(w2_t, b2, h), 0.0)     # (8, TB)
    out = fma_layer(w3_t, b3, h)                     # (actions, TB)
    ot_ref[...] = out.astype(ot_ref.dtype)


def pack_params(params, input_dims, actions):
    """Pack w1,b1,w2,b2,w3,b3 into a single (24, 128) f32 block.

    Each 8-row block holds the transposed weight (out_features, in_features)
    in the leading lanes; that layer's bias sits as a column at lane
    `bias_col` just past the weight lanes.
    """
    assert input_dims <= 64, "packing layout assumes small observation dim"
    assert actions <= _HIDDEN, "packing layout assumes actions <= 8"
    bias_col = max(_HIDDEN, input_dims)
    buf = jnp.zeros((_PACK_ROWS, _PACK_LANES), jnp.float32)
    buf = buf.at[0:8, 0:input_dims].set(params["w1"].T)
    buf = buf.at[0:8, bias_col:bias_col + 1].set(params["b1"].reshape(_HIDDEN, 1))
    buf = buf.at[8:16, 0:_HIDDEN].set(params["w2"].T)
    buf = buf.at[8:16, bias_col:bias_col + 1].set(params["b2"].reshape(_HIDDEN, 1))
    buf = buf.at[16:16 + actions, 0:_HIDDEN].set(params["w3"].T)
    buf = buf.at[16:16 + actions, bias_col:bias_col + 1].set(
        params["b3"].reshape(actions, 1))
    return buf


def network_forward(x, packed_params, actions, *, block_b=512):
    """Forward pass: x (B, input_dims) f32 -> logits (B, actions) f32."""
    B, input_dims = x.shape
    bias_col = max(_HIDDEN, input_dims)

    # Batch maps to lanes: pad up to a multiple of the lane-tile TB (>= 128).
    b_pad128 = ((B + 127) // 128) * 128
    tb = min(block_b, b_pad128)
    b_pad = ((B + tb - 1) // tb) * tb
    num_tiles = b_pad // tb

    xt = jnp.transpose(x)                                   # (input_dims, B)
    if b_pad != B:
        xt = jnp.pad(xt, ((0, 0), (0, b_pad - B)))

    kernel = functools.partial(_mlp_kernel, input_dims=input_dims,
                               actions=actions, bias_col=bias_col)

    out_t = pl.pallas_call(
        kernel,
        out_shape=jax.ShapeDtypeStruct((actions, b_pad), jnp.float32),
        grid=(num_tiles,),
        in_specs=[
            # Packed params: constant block index -> DMA'd once, stays resident.
            pl.BlockSpec((_PACK_ROWS, _PACK_LANES), lambda i: (0, 0)),
            # Activations: tiled over the batch (lane) axis, double-buffered.
            pl.BlockSpec((input_dims, tb), lambda i: (0, i)),
        ],
        out_specs=pl.BlockSpec((actions, tb), lambda i: (0, i)),
        compiler_params=pltpu.CompilerParams(
            dimension_semantics=("parallel",)),
    )(packed_params, xt)

    return jnp.transpose(out_t)[:B]                         # (B, actions)


def init_params(key, input_dims, actions):
    """Deterministic init matching torch.nn.Linear default:
    U(-1/sqrt(fan_in), 1/sqrt(fan_in)) for both weight and bias."""
    def linear(k, fan_in, fan_out):
        kw, kb = jax.random.split(k)
        bound = 1.0 / jnp.sqrt(jnp.float32(fan_in))
        w = jax.random.uniform(kw, (fan_in, fan_out), jnp.float32, -bound, bound)
        b = jax.random.uniform(kb, (1, fan_out), jnp.float32, -bound, bound)
        return w, b

    k1, k2, k3 = jax.random.split(key, 3)
    w1, b1 = linear(k1, input_dims, _HIDDEN)
    w2, b2 = linear(k2, _HIDDEN, _HIDDEN)
    w3, b3 = linear(k3, _HIDDEN, actions)
    return {"w1": w1, "b1": b1, "w2": w2, "b2": b2, "w3": w3, "b3": b3}


def network_forward_ref(x, p):
    """Pure-JAX reference for correctness (torch semantics: x @ W.T + b,
    here with weights stored as (in, out) so it's x @ W + b)."""
    h1 = jnp.maximum(x @ p["w1"] + p["b1"], 0.0)
    h2 = jnp.maximum(h1 @ p["w2"] + p["b2"], 0.0)
    return h2 @ p["w3"] + p["b3"]


if __name__ == "__main__":
    # CartPole: observation dim = 4, actions = 2.
    INPUT_DIMS, ACTIONS = 4, 2

    key = jax.random.PRNGKey(0)
    k_params, k_x = jax.random.split(key)

    params = init_params(k_params, INPUT_DIMS, ACTIONS)
    packed = pack_params(params, INPUT_DIMS, ACTIONS)

    # Batched A2C rollout states: many observations per pallas_call (per the
    # perf feedback); still tiny in absolute size (1024 x 4 f32 = 16 KiB).
    B = 1024
    x = jax.random.normal(k_x, (B, INPUT_DIMS), dtype=jnp.float32)

    out = jax.block_until_ready(network_forward(x, packed, ACTIONS))
    ref = network_forward_ref(x, params)
    assert out.shape == (B, ACTIONS)
    assert jnp.allclose(out, ref, atol=1e-5, rtol=1e-5), "mismatch vs reference"

    # Tiny / ragged batch path (single 128-lane tile, batch padded internally).
    out_small = jax.block_until_ready(network_forward(x[:8], packed, ACTIONS))
    assert out_small.shape == (8, ACTIONS)
    assert jnp.allclose(out_small, ref[:8], atol=1e-5, rtol=1e-5), "small-batch mismatch"

    print("KERNEL_OK")
</pallas_src>

<mosaic_0001>
module attributes {stable_mosaic.version = 11 : i64} {
  func.func @_mlp_kernel(%arg0: i32, %arg1: memref<24x128xf32, #tpu.memory_space<vmem>>, %arg2: memref<4x512xf32, #tpu.memory_space<vmem>>, %arg3: memref<2x512xf32, #tpu.memory_space<vmem>>) attributes {dimension_semantics = [#tpu.dimension_semantics<parallel>], iteration_bounds = array<i64: 2>, scalar_prefetch = 0 : i64, scratch_operands = 0 : i64, tpu.core_type = #tpu.core_type<tc>, window_params = [{pipeline_mode = #tpu.pipeline_mode<synchronous>, transform_indices = @transform_0, window_bounds = array<i64: 24, 128>}, {transform_indices = @transform_1, window_bounds = array<i64: 4, 512>}, {transform_indices = @transform_2, window_bounds = array<i64: 2, 512>}]} {
    %c0 = arith.constant 0 : index
    %c0_0 = arith.constant 0 : index
    %0 = vector.load %arg1[%c0, %c0_0] : memref<24x128xf32, #tpu.memory_space<vmem>>, vector<24x128xf32>
    %c0_1 = arith.constant 0 : index
    %c0_2 = arith.constant 0 : index
    %1 = vector.load %arg2[%c0_1, %c0_2] : memref<4x512xf32, #tpu.memory_space<vmem>>, vector<4x512xf32>
    %2 = vector.extract_strided_slice %0 {offsets = [0, 0], sizes = [8, 4], strides = [1, 1]} : vector<24x128xf32> to vector<8x4xf32>
    %3 = vector.extract_strided_slice %0 {offsets = [0, 8], sizes = [8, 1], strides = [1, 1]} : vector<24x128xf32> to vector<8x1xf32>
    %4 = vector.extract_strided_slice %0 {offsets = [8, 0], sizes = [8, 8], strides = [1, 1]} : vector<24x128xf32> to vector<8x8xf32>
    %5 = vector.extract_strided_slice %0 {offsets = [8, 8], sizes = [8, 1], strides = [1, 1]} : vector<24x128xf32> to vector<8x1xf32>
    %6 = vector.extract_strided_slice %0 {offsets = [16, 0], sizes = [2, 8], strides = [1, 1]} : vector<24x128xf32> to vector<2x8xf32>
    %7 = vector.extract_strided_slice %0 {offsets = [16, 8], sizes = [2, 1], strides = [1, 1]} : vector<24x128xf32> to vector<2x1xf32>
    %8 = vector.shape_cast %3 : vector<8x1xf32> to vector<8x1xf32>
    %9 = vector.broadcast %8 : vector<8x1xf32> to vector<8x512xf32>
    %10 = vector.extract_strided_slice %2 {offsets = [0, 0], sizes = [8, 1], strides = [1, 1]} : vector<8x4xf32> to vector<8x1xf32>
    %11 = vector.extract_strided_slice %1 {offsets = [0, 0], sizes = [1, 512], strides = [1, 1]} : vector<4x512xf32> to vector<1x512xf32>
    %12 = vector.broadcast %10 : vector<8x1xf32> to vector<8x512xf32>
    %13 = vector.broadcast %11 : vector<1x512xf32> to vector<8x512xf32>
    %14 = arith.mulf %12, %13 : vector<8x512xf32>
    %15 = arith.addf %9, %14 : vector<8x512xf32>
    %16 = vector.extract_strided_slice %2 {offsets = [0, 1], sizes = [8, 1], strides = [1, 1]} : vector<8x4xf32> to vector<8x1xf32>
    %17 = vector.extract_strided_slice %1 {offsets = [1, 0], sizes = [1, 512], strides = [1, 1]} : vector<4x512xf32> to vector<1x512xf32>
    %18 = vector.broadcast %16 : vector<8x1xf32> to vector<8x512xf32>
    %19 = vector.broadcast %17 : vector<1x512xf32> to vector<8x512xf32>
    %20 = arith.mulf %18, %19 : vector<8x512xf32>
    %21 = arith.addf %15, %20 : vector<8x512xf32>
    %22 = vector.extract_strided_slice %2 {offsets = [0, 2], sizes = [8, 1], strides = [1, 1]} : vector<8x4xf32> to vector<8x1xf32>
    %23 = vector.extract_strided_slice %1 {offsets = [2, 0], sizes = [1, 512], strides = [1, 1]} : vector<4x512xf32> to vector<1x512xf32>
    %24 = vector.broadcast %22 : vector<8x1xf32> to vector<8x512xf32>
    %25 = vector.broadcast %23 : vector<1x512xf32> to vector<8x512xf32>
    %26 = arith.mulf %24, %25 : vector<8x512xf32>
    %27 = arith.addf %21, %26 : vector<8x512xf32>
    %28 = vector.extract_strided_slice %2 {offsets = [0, 3], sizes = [8, 1], strides = [1, 1]} : vector<8x4xf32> to vector<8x1xf32>
    %29 = vector.extract_strided_slice %1 {offsets = [3, 0], sizes = [1, 512], strides = [1, 1]} : vector<4x512xf32> to vector<1x512xf32>
    %30 = vector.broadcast %28 : vector<8x1xf32> to vector<8x512xf32>
    %31 = vector.broadcast %29 : vector<1x512xf32> to vector<8x512xf32>
    %32 = arith.mulf %30, %31 : vector<8x512xf32>
    %33 = arith.addf %27, %32 : vector<8x512xf32>
    %cst = arith.constant 0.000000e+00 : f32
    %34 = vector.broadcast %cst : f32 to vector<8x512xf32>
    %35 = arith.maximumf %33, %34 : vector<8x512xf32>
    %36 = vector.shape_cast %5 : vector<8x1xf32> to vector<8x1xf32>
    %37 = vector.broadcast %36 : vector<8x1xf32> to vector<8x512xf32>
    %38 = vector.extract_strided_slice %4 {offsets = [0, 0], sizes = [8, 1], strides = [1, 1]} : vector<8x8xf32> to vector<8x1xf32>
    %39 = vector.extract_strided_slice %35 {offsets = [0, 0], sizes = [1, 512], strides = [1, 1]} : vector<8x512xf32> to vector<1x512xf32>
    %40 = vector.broadcast %38 : vector<8x1xf32> to vector<8x512xf32>
    %41 = vector.broadcast %39 : vector<1x512xf32> to vector<8x512xf32>
    %42 = arith.mulf %40, %41 : vector<8x512xf32>
    %43 = arith.addf %37, %42 : vector<8x512xf32>
    %44 = vector.extract_strided_slice %4 {offsets = [0, 1], sizes = [8, 1], strides = [1, 1]} : vector<8x8xf32> to vector<8x1xf32>
    %45 = vector.extract_strided_slice %35 {offsets = [1, 0], sizes = [1, 512], strides = [1, 1]} : vector<8x512xf32> to vector<1x512xf32>
    %46 = vector.broadcast %44 : vector<8x1xf32> to vector<8x512xf32>
    %47 = vector.broadcast %45 : vector<1x512xf32> to vector<8x512xf32>
    %48 = arith.mulf %46, %47 : vector<8x512xf32>
    %49 = arith.addf %43, %48 : vector<8x512xf32>
    %50 = vector.extract_strided_slice %4 {offsets = [0, 2], sizes = [8, 1], strides = [1, 1]} : vector<8x8xf32> to vector<8x1xf32>
    %51 = vector.extract_strided_slice %35 {offsets = [2, 0], sizes = [1, 512], strides = [1, 1]} : vector<8x512xf32> to vector<1x512xf32>
    %52 = vector.broadcast %50 : vector<8x1xf32> to vector<8x512xf32>
    %53 = vector.broadcast %51 : vector<1x512xf32> to vector<8x512xf32>
    %54 = arith.mulf %52, %53 : vector<8x512xf32>
    %55 = arith.addf %49, %54 : vector<8x512xf32>
    %56 = vector.extract_strided_slice %4 {offsets = [0, 3], sizes = [8, 1], strides = [1, 1]} : vector<8x8xf32> to vector<8x1xf32>
    %57 = vector.extract_strided_slice %35 {offsets = [3, 0], sizes = [1, 512], strides = [1, 1]} : vector<8x512xf32> to vector<1x512xf32>
    %58 = vector.broadcast %56 : vector<8x1xf32> to vector<8x512xf32>
    %59 = vector.broadcast %57 : vector<1x512xf32> to vector<8x512xf32>
    %60 = arith.mulf %58, %59 : vector<8x512xf32>
    %61 = arith.addf %55, %60 : vector<8x512xf32>
    %62 = vector.extract_strided_slice %4 {offsets = [0, 4], sizes = [8, 1], strides = [1, 1]} : vector<8x8xf32> to vector<8x1xf32>
    %63 = vector.extract_strided_slice %35 {offsets = [4, 0], sizes = [1, 512], strides = [1, 1]} : vector<8x512xf32> to vector<1x512xf32>
    %64 = vector.broadcast %62 : vector<8x1xf32> to vector<8x512xf32>
    %65 = vector.broadcast %63 : vector<1x512xf32> to vector<8x512xf32>
    %66 = arith.mulf %64, %65 : vector<8x512xf32>
    %67 = arith.addf %61, %66 : vector<8x512xf32>
    %68 = vector.extract_strided_slice %4 {offsets = [0, 5], sizes = [8, 1], strides = [1, 1]} : vector<8x8xf32> to vector<8x1xf32>
    %69 = vector.extract_strided_slice %35 {offsets = [5, 0], sizes = [1, 512], strides = [1, 1]} : vector<8x512xf32> to vector<1x512xf32>
    %70 = vector.broadcast %68 : vector<8x1xf32> to vector<8x512xf32>
    %71 = vector.broadcast %69 : vector<1x512xf32> to vector<8x512xf32>
    %72 = arith.mulf %70, %71 : vector<8x512xf32>
    %73 = arith.addf %67, %72 : vector<8x512xf32>
    %74 = vector.extract_strided_slice %4 {offsets = [0, 6], sizes = [8, 1], strides = [1, 1]} : vector<8x8xf32> to vector<8x1xf32>
    %75 = vector.extract_strided_slice %35 {offsets = [6, 0], sizes = [1, 512], strides = [1, 1]} : vector<8x512xf32> to vector<1x512xf32>
    %76 = vector.broadcast %74 : vector<8x1xf32> to vector<8x512xf32>
    %77 = vector.broadcast %75 : vector<1x512xf32> to vector<8x512xf32>
    %78 = arith.mulf %76, %77 : vector<8x512xf32>
    %79 = arith.addf %73, %78 : vector<8x512xf32>
    %80 = vector.extract_strided_slice %4 {offsets = [0, 7], sizes = [8, 1], strides = [1, 1]} : vector<8x8xf32> to vector<8x1xf32>
    %81 = vector.extract_strided_slice %35 {offsets = [7, 0], sizes = [1, 512], strides = [1, 1]} : vector<8x512xf32> to vector<1x512xf32>
    %82 = vector.broadcast %80 : vector<8x1xf32> to vector<8x512xf32>
    %83 = vector.broadcast %81 : vector<1x512xf32> to vector<8x512xf32>
    %84 = arith.mulf %82, %83 : vector<8x512xf32>
    %85 = arith.addf %79, %84 : vector<8x512xf32>
    %cst_3 = arith.constant 0.000000e+00 : f32
    %86 = vector.broadcast %cst_3 : f32 to vector<8x512xf32>
    %87 = arith.maximumf %85, %86 : vector<8x512xf32>
    %88 = vector.shape_cast %7 : vector<2x1xf32> to vector<2x1xf32>
    %89 = vector.broadcast %88 : vector<2x1xf32> to vector<2x512xf32>
    %90 = vector.extract_strided_slice %6 {offsets = [0, 0], sizes = [2, 1], strides = [1, 1]} : vector<2x8xf32> to vector<2x1xf32>
    %91 = vector.extract_strided_slice %87 {offsets = [0, 0], sizes = [1, 512], strides = [1, 1]} : vector<8x512xf32> to vector<1x512xf32>
    %92 = vector.broadcast %90 : vector<2x1xf32> to vector<2x512xf32>
    %93 = vector.broadcast %91 : vector<1x512xf32> to vector<2x512xf32>
    %94 = arith.mulf %92, %93 : vector<2x512xf32>
    %95 = arith.addf %89, %94 : vector<2x512xf32>
    %96 = vector.extract_strided_slice %6 {offsets = [0, 1], sizes = [2, 1], strides = [1, 1]} : vector<2x8xf32> to vector<2x1xf32>
    %97 = vector.extract_strided_slice %87 {offsets = [1, 0], sizes = [1, 512], strides = [1, 1]} : vector<8x512xf32> to vector<1x512xf32>
    %98 = vector.broadcast %96 : vector<2x1xf32> to vector<2x512xf32>
    %99 = vector.broadcast %97 : vector<1x512xf32> to vector<2x512xf32>
    %100 = arith.mulf %98, %99 : vector<2x512xf32>
    %101 = arith.addf %95, %100 : vector<2x512xf32>
    %102 = vector.extract_strided_slice %6 {offsets = [0, 2], sizes = [2, 1], strides = [1, 1]} : vector<2x8xf32> to vector<2x1xf32>
    %103 = vector.extract_strided_slice %87 {offsets = [2, 0], sizes = [1, 512], strides = [1, 1]} : vector<8x512xf32> to vector<1x512xf32>
    %104 = vector.broadcast %102 : vector<2x1xf32> to vector<2x512xf32>
    %105 = vector.broadcast %103 : vector<1x512xf32> to vector<2x512xf32>
    %106 = arith.mulf %104, %105 : vector<2x512xf32>
    %107 = arith.addf %101, %106 : vector<2x512xf32>
    %108 = vector.extract_strided_slice %6 {offsets = [0, 3], sizes = [2, 1], strides = [1, 1]} : vector<2x8xf32> to vector<2x1xf32>
    %109 = vector.extract_strided_slice %87 {offsets = [3, 0], sizes = [1, 512], strides = [1, 1]} : vector<8x512xf32> to vector<1x512xf32>
    %110 = vector.broadcast %108 : vector<2x1xf32> to vector<2x512xf32>
    %111 = vector.broadcast %109 : vector<1x512xf32> to vector<2x512xf32>
    %112 = arith.mulf %110, %111 : vector<2x512xf32>
    %113 = arith.addf %107, %112 : vector<2x512xf32>
    %114 = vector.extract_strided_slice %6 {offsets = [0, 4], sizes = [2, 1], strides = [1, 1]} : vector<2x8xf32> to vector<2x1xf32>
    %115 = vector.extract_strided_slice %87 {offsets = [4, 0], sizes = [1, 512], strides = [1, 1]} : vector<8x512xf32> to vector<1x512xf32>
    %116 = vector.broadcast %114 : vector<2x1xf32> to vector<2x512xf32>
    %117 = vector.broadcast %115 : vector<1x512xf32> to vector<2x512xf32>
    %118 = arith.mulf %116, %117 : vector<2x512xf32>
    %119 = arith.addf %113, %118 : vector<2x512xf32>
    %120 = vector.extract_strided_slice %6 {offsets = [0, 5], sizes = [2, 1], strides = [1, 1]} : vector<2x8xf32> to vector<2x1xf32>
    %121 = vector.extract_strided_slice %87 {offsets = [5, 0], sizes = [1, 512], strides = [1, 1]} : vector<8x512xf32> to vector<1x512xf32>
    %122 = vector.broadcast %120 : vector<2x1xf32> to vector<2x512xf32>
    %123 = vector.broadcast %121 : vector<1x512xf32> to vector<2x512xf32>
    %124 = arith.mulf %122, %123 : vector<2x512xf32>
    %125 = arith.addf %119, %124 : vector<2x512xf32>
    %126 = vector.extract_strided_slice %6 {offsets = [0, 6], sizes = [2, 1], strides = [1, 1]} : vector<2x8xf32> to vector<2x1xf32>
    %127 = vector.extract_strided_slice %87 {offsets = [6, 0], sizes = [1, 512], strides = [1, 1]} : vector<8x512xf32> to vector<1x512xf32>
    %128 = vector.broadcast %126 : vector<2x1xf32> to vector<2x512xf32>
    %129 = vector.broadcast %127 : vector<1x512xf32> to vector<2x512xf32>
    %130 = arith.mulf %128, %129 : vector<2x512xf32>
    %131 = arith.addf %125, %130 : vector<2x512xf32>
    %132 = vector.extract_strided_slice %6 {offsets = [0, 7], sizes = [2, 1], strides = [1, 1]} : vector<2x8xf32> to vector<2x1xf32>
    %133 = vector.extract_strided_slice %87 {offsets = [7, 0], sizes = [1, 512], strides = [1, 1]} : vector<8x512xf32> to vector<1x512xf32>
    %134 = vector.broadcast %132 : vector<2x1xf32> to vector<2x512xf32>
    %135 = vector.broadcast %133 : vector<1x512xf32> to vector<2x512xf32>
    %136 = arith.mulf %134, %135 : vector<2x512xf32>
    %137 = arith.addf %131, %136 : vector<2x512xf32>
    %c0_4 = arith.constant 0 : index
    %c0_5 = arith.constant 0 : index
    %138 = vector.load %arg3[%c0_4, %c0_5] : memref<2x512xf32, #tpu.memory_space<vmem>>, vector<2x512xf32>
    tpu.vector_store %arg3[%c0_4, %c0_5], %137 {strides = array<i32>} : memref<2x512xf32, #tpu.memory_space<vmem>>, vector<2x512xf32>,
    return
  }
  func.func @transform_0(%arg0: i32) -> (i32, i32) {
    %c0_i32 = arith.constant 0 : i32
    %c0_i32_0 = arith.constant 0 : i32
    %c0_i32_1 = arith.constant 0 : i32
    return %c0_i32, %c0_i32_0 : i32, i32
  }
  func.func @transform_1(%arg0: i32) -> (i32, i32) {
    %c0_i32 = arith.constant 0 : i32
    %c0_i32_0 = arith.constant 0 : i32
    return %c0_i32, %arg0 : i32, i32
  }
  func.func @transform_2(%arg0: i32) -> (i32, i32) {
    %c0_i32 = arith.constant 0 : i32
    %c0_i32_0 = arith.constant 0 : i32
    return %c0_i32, %arg0 : i32, i32
  }
}

</mosaic_0001>

<llo_original>
// kernel: tpu_custom_call.1
$region0: #{tpu_custom_call.1}
  #allocation0 [shape = 'u32[]', space=smem, size = 0x4, offset = 0x4, fixed_abs, tag = 'smem constant byte address 0x4 - core index']
  #allocation1 [shape = 'u32[144,128]{1,0:T(1,128)}', space=vmem, size = 0x12000, scoped, tag = 'internal scratch']
  %s0 = inlined_call_operand.hbm [shape: f32[24,128], index: 0, kind: input, shape index: {}]
  %s1 = inlined_call_operand.hbm [shape: f32[4,1024], index: 1, kind: input, shape index: {}]
  %s2 = inlined_call_operand.hbm [shape: f32[2,1024], index: 2, kind: output, shape index: {}]
  %s3 = sld [smem:[#allocation0]]
  $region49: #{tpu_custom_call.1} parent=0
    _
  %s5 = ssub.s32 1, %s3
  %s6 = scalar_select 0, %s5, %s3
  $region1: #{tpu_custom_call.1} parent=0
    #allocation2 [shape = 'u8[12288]{0}', space=vmem, size = 0x3000, scoped, tag = 'input window, operand 0, single buffered']
    #allocation3 [shape = 's32[2]{0}', space=sflag, size = 0x8, scoped, tag = 'scoped memory for tpu_custom_call.1']
    #allocation4 [shape = 's32[2]{0}', space=sflag, size = 0x8, scoped, tag = 'scoped memory for tpu_custom_call.1']
    #allocation5 [shape = 'u8[16384]{0}', space=vmem, size = 0x4000, scoped, tag = 'input window, operand 1']
    #allocation6 [shape = 's32[2]{0}', space=sflag, size = 0x8, scoped, tag = 'scoped memory for tpu_custom_call.1']
    #allocation7 [shape = 'u8[8192]{0}', space=vmem, size = 0x2000, scoped, tag = 'output window, operand 0']
    %7 = vsyncpa [#allocation3], 0
    %8 = vsyncpa [#allocation6], 0
    %s9 = scalar_lea.sflag [#allocation6], 1
    %10 = vsyncpa %s9, 0
    %11 = vsyncpa [#allocation4], 0
    %s12 = scalar_lea.sflag [#allocation4], 1
    %13 = vsyncpa %s12, 0
    loop: start=0, step=1, limit=4
    $region2: #{tpu_custom_call.1} parent=1 // loop_pre_header
      _
    $region3: #{tpu_custom_call.1} parent=1 // loop_header
      %s15 = sphi 0, %s19
      %p16 = scmp.ge.s32.totalorder %s15, 4
      %s23 = sphi 0, %s23
      %s25 = sphi 0, %s23
      %s26 = sphi 0, %s25
      %s40 = sphi 0, %s26
      %s46 = sphi 0, %s48
      %s49 = sphi 0, %s46
      %s50 = sphi 0, %s49
      %s66 = sphi 0, %s50
      %s72 = sphi 0, %s74
      %s75 = sphi 0, %s72
      %s76 = sphi 0, %s75
      %s92 = sphi 0, %s76
    $region4: #{tpu_custom_call.1} parent=1 // loop_header_branch
      %18 = sbr.rel (%p16) target = $region8
    $region5: #{tpu_custom_call.1} parent=1 // loop_body
      %s20 = ssub.s32 %s15, 1
      %s21 = ssub.s32 %s15, 2
      %s22 = sadd.s32 %s15, 1
      %s24 = sadd.s32 %s23, 1
      %p27 = scmp.eq.s32.totalorder %s15, 1
      %p28 = scmp.ne.s32.totalorder %s23, %s25
      %p29 = scmp.eq.s32.totalorder %s15, 0
      %p30 = por %p28, %p29
      %p31 = scmp.ne.s32.totalorder %s23, %s25
      %p32 = scmp.eq.s32.totalorder %s20, 1
      %p33 = por %p31, %p32
      %p34 = scmp.ne.s32.totalorder %s25, %s26
      %p35 = scmp.eq.s32.totalorder %s20, 0
      %p36 = por %p34, %p35
      %p37 = scmp.ne.s32.totalorder %s25, %s26
      %p38 = scmp.eq.s32.totalorder %s21, 1
      %p39 = por %p37, %p38
      %p41 = scmp.ne.s32.totalorder %s26, %s40
      %p42 = scmp.eq.s32.totalorder %s21, 0
      %p43 = por %p41, %p42
      %s44 = ssub.s32 %s15, %s22
      %p45 = scmp.eq.s32.totalorder %s44, 0
      %s47 = sadd.s32 %s46, 1
      %s48 = scalar_select %p45, %s46, %s47
      %p51 = pneg %p45
      %p52 = scmp.eq.s32.totalorder %s15, 1
      %p53 = por %p51, %p52
      %p54 = scmp.ne.s32.totalorder %s46, %s49
      %p55 = scmp.eq.s32.totalorder %s15, 0
      %p56 = por %p54, %p55
      %p57 = scmp.ne.s32.totalorder %s46, %s49
      %p58 = scmp.eq.s32.totalorder %s20, 1
      %p59 = por %p57, %p58
      %p60 = scmp.ne.s32.totalorder %s49, %s50
      %p61 = scmp.eq.s32.totalorder %s20, 0
      %p62 = por %p60, %p61
      %p63 = scmp.ne.s32.totalorder %s49, %s50
      %p64 = scmp.eq.s32.totalorder %s21, 1
      %p65 = por %p63, %p64
      %p67 = scmp.ne.s32.totalorder %s50, %s66
      %p68 = scmp.eq.s32.totalorder %s21, 0
      %p69 = por %p67, %p68
      %s70 = ssub.s32 %s15, %s22
      %p71 = scmp.eq.s32.totalorder %s70, 0
      %s73 = sadd.s32 %s72, 1
      %s74 = scalar_select %p71, %s72, %s73
      %p77 = pneg %p71
      %p78 = scmp.eq.s32.totalorder %s15, 1
      %p79 = por %p77, %p78
      %p80 = scmp.ne.s32.totalorder %s72, %s75
      %p81 = scmp.eq.s32.totalorder %s15, 0
      %p82 = por %p80, %p81
      %p83 = scmp.ne.s32.totalorder %s72, %s75
      %p84 = scmp.eq.s32.totalorder %s20, 1
      %p85 = por %p83, %p84
      %p86 = scmp.ne.s32.totalorder %s75, %s76
      %p87 = scmp.eq.s32.totalorder %s20, 0
      %p88 = por %p86, %p87
      %p89 = scmp.ne.s32.totalorder %s75, %s76
      %p90 = scmp.eq.s32.totalorder %s21, 1
      %p91 = por %p89, %p90
      %p93 = scmp.ne.s32.totalorder %s76, %s92
      %p94 = scmp.eq.s32.totalorder %s21, 0
      %p95 = por %p93, %p94
      %p96 = scmp.le.s32.totalorder 1, %s15
      %p97 = scmp.lt.s32.totalorder %s15, 3
      %p98 = pnand %p96, %p97
      %p99 = pneg %p98
      // Predicated region
      $region9: #{tpu_custom_call.1} parent=5 // pred_check
        _
      $region10: #{tpu_custom_call.1} parent=5 // pred_check_branch
        %101 = sbr.rel (%p98) target = $region12
      $region11: #{tpu_custom_call.1} parent=5 // pred_region
        %s102 = ssub.s32 %s15, 1
        // Predicated region
        $region13: #{tpu_custom_call.1} parent=11 // pred_check
          %p103 = pneg %p36
        $region14: #{tpu_custom_call.1} parent=11 // pred_check_branch
          %105 = sbr.rel (%p103) target = $region16
        $region15: #{tpu_custom_call.1} parent=11 // pred_region
          %s107 = ssub.s32 384, 384
          %108 = vsyncadd [#allocation3], %s107
          %s109 = sshll.u32 [#allocation2], 4
          %s110 = int_to_ptr.vmem [resolvable:$true] %s109
          %115 = dma.hbm_to_vmem [thread:$0]  %s0, 384, %s110, [#allocation3], 128, 128, 8
        $region16: #{tpu_custom_call.1} parent=11 // pred_fallthru
          _
      $region12: #{tpu_custom_call.1} parent=5 // pred_fallthru
        _
      %p116 = scmp.lt.s32.totalorder %s15, 2
      // Predicated region
      $region17: #{tpu_custom_call.1} parent=5 // pred_check
        %p117 = pneg %p116
      $region18: #{tpu_custom_call.1} parent=5 // pred_check_branch
        %119 = sbr.rel (%p117) target = $region20
      $region19: #{tpu_custom_call.1} parent=5 // pred_region
        // Predicated region
        $region21: #{tpu_custom_call.1} parent=19 // pred_check
          %p120 = pneg %p56
        $region22: #{tpu_custom_call.1} parent=19 // pred_check_branch
          %122 = sbr.rel (%p120) target = $region24
        $region23: #{tpu_custom_call.1} parent=19 // pred_region
          %s123 = sand.u32 %s46, 1
          %s124 = scalar_lea.sflag [#allocation6], %s123
          %s125 = sand.u32 %s46, 1
          %s126 = smul.addr %s125, 16
          %s127 = scalar_lea.vmem [#allocation5], %s126
          %s128 = smul.u32 4, %s15
          %s130 = ssub.s32 256, 256
          %131 = vsyncadd %s124, %s130
          %s132 = smul.addr %s128, 64
          %s133 = scalar_lea.hbm %s1, %s132
          %s135 = sshll.u32 %s127, 4
          %s136 = int_to_ptr.vmem [resolvable:$true] %s135
          %138 = dma.hbm_to_vmem [thread:$0]  %s133, 256, %s136, %s124
        $region24: #{tpu_custom_call.1} parent=19 // pred_fallthru
          _
      $region20: #{tpu_custom_call.1} parent=5 // pred_fallthru
        _
      %p139 = scmp.le.s32.totalorder 1, %s15
      %p140 = scmp.lt.s32.totalorder %s15, 3
      %p141 = pnand %p139, %p140
      %p142 = pneg %p141
      // Predicated region
      $region25: #{tpu_custom_call.1} parent=5 // pred_check
        _
      $region26: #{tpu_custom_call.1} parent=5 // pred_check_branch
        %144 = sbr.rel (%p141) target = $region28
      $region27: #{tpu_custom_call.1} parent=5 // pred_region
        %s145 = ssub.s32 %s15, 1
        // Predicated region
        $region29: #{tpu_custom_call.1} parent=27 // pred_check
          %p146 = pneg %p36
        $region30: #{tpu_custom_call.1} parent=27 // pred_check_branch
          %148 = sbr.rel (%p146) target = $region32
        $region31: #{tpu_custom_call.1} parent=27 // pred_region
          %149 = dma.done [#allocation3], 384
        $region32: #{tpu_custom_call.1} parent=27 // pred_fallthru
          _
        %s150 = sand.u32 %s49, 1
        %s151 = scalar_lea.sflag [#allocation6], %s150
        %s152 = sand.u32 %s49, 1
        %s153 = smul.addr %s152, 16
        %s154 = scalar_lea.vmem [#allocation5], %s153
        // Predicated region
        $region33: #{tpu_custom_call.1} parent=27 // pred_check
          %p155 = pneg %p62
        $region34: #{tpu_custom_call.1} parent=27 // pred_check_branch
          %157 = sbr.rel (%p155) target = $region36
        $region35: #{tpu_custom_call.1} parent=27 // pred_region
          %158 = dma.done %s151, 256
        $region36: #{tpu_custom_call.1} parent=27 // pred_fallthru
          _
        %p159 = pneg %p36
        %p160 = pneg %p33
        %s161 = sand.u32 %s49, 1
        %s162 = scalar_lea.sflag [#allocation6], %s161
        %s163 = sand.u32 %s49, 1
        %s164 = smul.addr %s163, 16
        %s165 = scalar_lea.vmem [#allocation5], %s164
        %p166 = pneg %p62
        %p167 = pneg %p59
        %p168 = pneg %p88
        %p169 = pneg %p85
        %s170 = sand.u32 %s75, 1
        %s171 = scalar_lea.sflag [#allocation4], %s170
        %s172 = sand.u32 %s75, 1
        %s173 = smul.addr %s172, 8
        %s174 = scalar_lea.vmem [#allocation7], %s173
        %s175 = smul.u32 4, %s20
        %s176 = smul.u32 4, %s20
        %v177 = vld [vmem:[#allocation2] sm:$0xff]
        %v178 = vld [vmem:[#allocation2 + $0x8] sm:$0xff]
        %v179 = vld [vmem:[#allocation2 + $0x10] sm:$0xff]
        %v180 = vld [vmem:[%s154] sm:$0xff]
        %v181 = vld [vmem:[%s154 + $0x8] sm:$0xff]
        %183 = vset.pattern.permute.xlu0 8
        %184 = vperm.xlu0 %183, %v177
        %v185 = vpop.permute.xlu0 %184
        %187 = vset.pattern.permute.xlu0 0
        %188 = vperm.xlu0 %187, %v177
        %v189 = vpop.permute.xlu0 %188
        %v193 = vlaneseq
        %v194 = vshrl.u32 %v193, 7
        %v195 = vsub.s32 0, %v194
        %v196 = vrot.slane %v180, %v195
        %v197 = vlaneseq
        %v198 = vshrl.u32 %v197, 7
        %v199 = vsub.s32 4, %v198
        %v200 = vrot.slane %v180, %v199
        %v201 = vlaneseq
        %v202 = vshrl.u32 %v201, 7
        %v203 = vsub.s32 0, %v202
        %v204 = vrot.slane %v181, %v203
        %v205 = vlaneseq
        %v206 = vshrl.u32 %v205, 7
        %v207 = vsub.s32 4, %v206
        %v208 = vrot.slane %v181, %v207
        %v213 = vlaneseq
        %v214 = vshrl.u32 %v213, 7
        %v215 = vsub.s32 0, %v214
        %v216 = vrot.slane %v196, %v215
        %v217 = vlaneseq
        %v218 = vshrl.u32 %v217, 7
        %v219 = vsub.s32 0, %v218
        %v220 = vrot.slane %v200, %v219
        %v221 = vlaneseq
        %v222 = vshrl.u32 %v221, 7
        %v223 = vsub.s32 0, %v222
        %v224 = vrot.slane %v204, %v223
        %v225 = vlaneseq
        %v226 = vshrl.u32 %v225, 7
        %v227 = vsub.s32 0, %v226
        %v228 = vrot.slane %v208, %v227
        %v229 = vmul.f32 %v189, %v216
        %v230 = vmul.f32 %v189, %v220
        %v231 = vmul.f32 %v189, %v224
        %v232 = vmul.f32 %v189, %v228
        %v233 = vadd.f32 %v185, %v229
        %v234 = vadd.f32 %v185, %v230
        %v235 = vadd.f32 %v185, %v231
        %v236 = vadd.f32 %v185, %v232
        %237 = vset.pattern.permute.xlu0 1
        %238 = vperm.xlu0 %237, %v177
        %v239 = vpop.permute.xlu0 %238
        %v241 = vlaneseq
        %v242 = vshrl.u32 %v241, 7
        %v243 = vsub.s32 1, %v242
        %v244 = vrot.slane %v180, %v243
        %v245 = vlaneseq
        %v246 = vshrl.u32 %v245, 7
        %v247 = vsub.s32 5, %v246
        %v248 = vrot.slane %v180, %v247
        %v249 = vlaneseq
        %v250 = vshrl.u32 %v249, 7
        %v251 = vsub.s32 1, %v250
        %v252 = vrot.slane %v181, %v251
        %v253 = vlaneseq
        %v254 = vshrl.u32 %v253, 7
        %v255 = vsub.s32 5, %v254
        %v256 = vrot.slane %v181, %v255
        %v261 = vlaneseq
        %v262 = vshrl.u32 %v261, 7
        %v263 = vsub.s32 1, %v262
        %v264 = vrot.slane %v244, %v263
        %v265 = vlaneseq
        %v266 = vshrl.u32 %v265, 7
        %v267 = vsub.s32 1, %v266
        %v268 = vrot.slane %v248, %v267
        %v269 = vlaneseq
        %v270 = vshrl.u32 %v269, 7
        %v271 = vsub.s32 1, %v270
        %v272 = vrot.slane %v252, %v271
        %v273 = vlaneseq
        %v274 = vshrl.u32 %v273, 7
        %v275 = vsub.s32 1, %v274
        %v276 = vrot.slane %v256, %v275
        %v277 = vmul.f32 %v239, %v264
        %v278 = vmul.f32 %v239, %v268
        %v279 = vmul.f32 %v239, %v272
        %v280 = vmul.f32 %v239, %v276
        %v281 = vadd.f32 %v233, %v277
        %v282 = vadd.f32 %v234, %v278
        %v283 = vadd.f32 %v235, %v279
        %v284 = vadd.f32 %v236, %v280
        %285 = vset.pattern.permute.xlu0 2
        %286 = vperm.xlu0 %285, %v177
        %v287 = vpop.permute.xlu0 %286
        %v289 = vlaneseq
        %v290 = vshrl.u32 %v289, 7
        %v291 = vsub.s32 2, %v290
        %v292 = vrot.slane %v180, %v291
        %v293 = vlaneseq
        %v294 = vshrl.u32 %v293, 7
        %v295 = vsub.s32 6, %v294
        %v296 = vrot.slane %v180, %v295
        %v297 = vlaneseq
        %v298 = vshrl.u32 %v297, 7
        %v299 = vsub.s32 2, %v298
        %v300 = vrot.slane %v181, %v299
        %v301 = vlaneseq
        %v302 = vshrl.u32 %v301, 7
        %v303 = vsub.s32 6, %v302
        %v304 = vrot.slane %v181, %v303
        %v309 = vlaneseq
        %v310 = vshrl.u32 %v309, 7
        %v311 = vsub.s32 2, %v310
        %v312 = vrot.slane %v292, %v311
        %v313 = vlaneseq
        %v314 = vshrl.u32 %v313, 7
        %v315 = vsub.s32 2, %v314
        %v316 = vrot.slane %v296, %v315
        %v317 = vlaneseq
        %v318 = vshrl.u32 %v317, 7
        %v319 = vsub.s32 2, %v318
        %v320 = vrot.slane %v300, %v319
        %v321 = vlaneseq
        %v322 = vshrl.u32 %v321, 7
        %v323 = vsub.s32 2, %v322
        %v324 = vrot.slane %v304, %v323
        %v325 = vmul.f32 %v287, %v312
        %v326 = vmul.f32 %v287, %v316
        %v327 = vmul.f32 %v287, %v320
        %v328 = vmul.f32 %v287, %v324
        %v329 = vadd.f32 %v281, %v325
        %v330 = vadd.f32 %v282, %v326
        %v331 = vadd.f32 %v283, %v327
        %v332 = vadd.f32 %v284, %v328
        %333 = vset.pattern.permute.xlu0 3
        %334 = vperm.xlu0 %333, %v177
        %v335 = vpop.permute.xlu0 %334
        %v337 = vlaneseq
        %v338 = vshrl.u32 %v337, 7
        %v339 = vsub.s32 3, %v338
        %v340 = vrot.slane %v180, %v339
        %v341 = vlaneseq
        %v342 = vshrl.u32 %v341, 7
        %v343 = vsub.s32 7, %v342
        %v344 = vrot.slane %v180, %v343
        %v345 = vlaneseq
        %v346 = vshrl.u32 %v345, 7
        %v347 = vsub.s32 3, %v346
        %v348 = vrot.slane %v181, %v347
        %v349 = vlaneseq
        %v350 = vshrl.u32 %v349, 7
        %v351 = vsub.s32 7, %v350
        %v352 = vrot.slane %v181, %v351
        %v357 = vlaneseq
        %v358 = vshrl.u32 %v357, 7
        %v359 = vsub.s32 3, %v358
        %v360 = vrot.slane %v340, %v359
        %v361 = vlaneseq
        %v362 = vshrl.u32 %v361, 7
        %v363 = vsub.s32 3, %v362
        %v364 = vrot.slane %v344, %v363
        %v365 = vlaneseq
        %v366 = vshrl.u32 %v365, 7
        %v367 = vsub.s32 3, %v366
        %v368 = vrot.slane %v348, %v367
        %v369 = vlaneseq
        %v370 = vshrl.u32 %v369, 7
        %v371 = vsub.s32 3, %v370
        %v372 = vrot.slane %v352, %v371
        %v373 = vmul.f32 %v335, %v360
        %v374 = vmul.f32 %v335, %v364
        %v375 = vmul.f32 %v335, %v368
        %v376 = vmul.f32 %v335, %v372
        %v377 = vadd.f32 %v329, %v373
        %v378 = vadd.f32 %v330, %v374
        %v379 = vadd.f32 %v331, %v375
        %v380 = vadd.f32 %v332, %v376
        %v381 = vmax.f32 %v377, 0.0
        %v382 = vmax.f32 %v378, 0.0
        %v383 = vmax.f32 %v379, 0.0
        %v384 = vmax.f32 %v380, 0.0
        %386 = vset.pattern.permute.xlu0 8
        %387 = vperm.xlu0 %386, %v178
        %v388 = vpop.permute.xlu0 %387
        %390 = vset.pattern.permute.xlu0 0
        %391 = vperm.xlu0 %390, %v178
        %v392 = vpop.permute.xlu0 %391
        %v394 = vlaneseq
        %v395 = vshrl.u32 %v394, 7
        %v396 = vsub.s32 0, %v395
        %v397 = vrot.slane %v381, %v396
        %v398 = vlaneseq
        %v399 = vshrl.u32 %v398, 7
        %v400 = vsub.s32 0, %v399
        %v401 = vrot.slane %v382, %v400
        %v402 = vlaneseq
        %v403 = vshrl.u32 %v402, 7
        %v404 = vsub.s32 0, %v403
        %v405 = vrot.slane %v383, %v404
        %v406 = vlaneseq
        %v407 = vshrl.u32 %v406, 7
        %v408 = vsub.s32 0, %v407
        %v409 = vrot.slane %v384, %v408
        %v410 = vmul.f32 %v392, %v397
        %v411 = vmul.f32 %v392, %v401
        %v412 = vmul.f32 %v392, %v405
        %v413 = vmul.f32 %v392, %v409
        %v414 = vadd.f32 %v388, %v410
        %v415 = vadd.f32 %v388, %v411
        %v416 = vadd.f32 %v388, %v412
        %v417 = vadd.f32 %v388, %v413
        %418 = vset.pattern.permute.xlu0 1
        %419 = vperm.xlu0 %418, %v178
        %v420 = vpop.permute.xlu0 %419
        %v422 = vlaneseq
        %v423 = vshrl.u32 %v422, 7
        %v424 = vsub.s32 1, %v423
        %v425 = vrot.slane %v381, %v424
        %v426 = vlaneseq
        %v427 = vshrl.u32 %v426, 7
        %v428 = vsub.s32 1, %v427
        %v429 = vrot.slane %v382, %v428
        %v430 = vlaneseq
        %v431 = vshrl.u32 %v430, 7
        %v432 = vsub.s32 1, %v431
        %v433 = vrot.slane %v383, %v432
        %v434 = vlaneseq
        %v435 = vshrl.u32 %v434, 7
        %v436 = vsub.s32 1, %v435
        %v437 = vrot.slane %v384, %v436
        %v438 = vmul.f32 %v420, %v425
        %v439 = vmul.f32 %v420, %v429
        %v440 = vmul.f32 %v420, %v433
        %v441 = vmul.f32 %v420, %v437
        %v442 = vadd.f32 %v414, %v438
        %v443 = vadd.f32 %v415, %v439
        %v444 = vadd.f32 %v416, %v440
        %v445 = vadd.f32 %v417, %v441
        %446 = vset.pattern.permute.xlu0 2
        %447 = vperm.xlu0 %446, %v178
        %v448 = vpop.permute.xlu0 %447
        %v450 = vlaneseq
        %v451 = vshrl.u32 %v450, 7
        %v452 = vsub.s32 2, %v451
        %v453 = vrot.slane %v381, %v452
        %v454 = vlaneseq
        %v455 = vshrl.u32 %v454, 7
        %v456 = vsub.s32 2, %v455
        %v457 = vrot.slane %v382, %v456
        %v458 = vlaneseq
        %v459 = vshrl.u32 %v458, 7
        %v460 = vsub.s32 2, %v459
        %v461 = vrot.slane %v383, %v460
        %v462 = vlaneseq
        %v463 = vshrl.u32 %v462, 7
        %v464 = vsub.s32 2, %v463
        %v465 = vrot.slane %v384, %v464
        %v466 = vmul.f32 %v448, %v453
        %v467 = vmul.f32 %v448, %v457
        %v468 = vmul.f32 %v448, %v461
        %v469 = vmul.f32 %v448, %v465
        %v470 = vadd.f32 %v442, %v466
        %v471 = vadd.f32 %v443, %v467
        %v472 = vadd.f32 %v444, %v468
        %v473 = vadd.f32 %v445, %v469
        %474 = vset.pattern.permute.xlu0 3
        %475 = vperm.xlu0 %474, %v178
        %v476 = vpop.permute.xlu0 %475
        %v478 = vlaneseq
        %v479 = vshrl.u32 %v478, 7
        %v480 = vsub.s32 3, %v479
        %v481 = vrot.slane %v381, %v480
        %v482 = vlaneseq
        %v483 = vshrl.u32 %v482, 7
        %v484 = vsub.s32 3, %v483
        %v485 = vrot.slane %v382, %v484
        %v486 = vlaneseq
        %v487 = vshrl.u32 %v486, 7
        %v488 = vsub.s32 3, %v487
        %v489 = vrot.slane %v383, %v488
        %v490 = vlaneseq
        %v491 = vshrl.u32 %v490, 7
        %v492 = vsub.s32 3, %v491
        %v493 = vrot.slane %v384, %v492
        %v494 = vmul.f32 %v476, %v481
        %v495 = vmul.f32 %v476, %v485
        %v496 = vmul.f32 %v476, %v489
        %v497 = vmul.f32 %v476, %v493
        %v498 = vadd.f32 %v470, %v494
        %v499 = vadd.f32 %v471, %v495
        %v500 = vadd.f32 %v472, %v496
        %v501 = vadd.f32 %v473, %v497
        %502 = vset.pattern.permute.xlu0 4
        %503 = vperm.xlu0 %502, %v178
        %v504 = vpop.permute.xlu0 %503
        %v506 = vlaneseq
        %v507 = vshrl.u32 %v506, 7
        %v508 = vsub.s32 4, %v507
        %v509 = vrot.slane %v381, %v508
        %v510 = vlaneseq
        %v511 = vshrl.u32 %v510, 7
        %v512 = vsub.s32 4, %v511
        %v513 = vrot.slane %v382, %v512
        %v514 = vlaneseq
        %v515 = vshrl.u32 %v514, 7
        %v516 = vsub.s32 4, %v515
        %v517 = vrot.slane %v383, %v516
        %v518 = vlaneseq
        %v519 = vshrl.u32 %v518, 7
        %v520 = vsub.s32 4, %v519
        %v521 = vrot.slane %v384, %v520
        %v522 = vmul.f32 %v504, %v509
        %v523 = vmul.f32 %v504, %v513
        %v524 = vmul.f32 %v504, %v517
        %v525 = vmul.f32 %v504, %v521
        %v526 = vadd.f32 %v498, %v522
        %v527 = vadd.f32 %v499, %v523
        %v528 = vadd.f32 %v500, %v524
        %v529 = vadd.f32 %v501, %v525
        %530 = vset.pattern.permute.xlu0 5
        %531 = vperm.xlu0 %530, %v178
        %v532 = vpop.permute.xlu0 %531
        %v534 = vlaneseq
        %v535 = vshrl.u32 %v534, 7
        %v536 = vsub.s32 5, %v535
        %v537 = vrot.slane %v381, %v536
        %v538 = vlaneseq
        %v539 = vshrl.u32 %v538, 7
        %v540 = vsub.s32 5, %v539
        %v541 = vrot.slane %v382, %v540
        %v542 = vlaneseq
        %v543 = vshrl.u32 %v542, 7
        %v544 = vsub.s32 5, %v543
        %v545 = vrot.slane %v383, %v544
        %v546 = vlaneseq
        %v547 = vshrl.u32 %v546, 7
        %v548 = vsub.s32 5, %v547
        %v549 = vrot.slane %v384, %v548
        %v550 = vmul.f32 %v532, %v537
        %v551 = vmul.f32 %v532, %v541
        %v552 = vmul.f32 %v532, %v545
        %v553 = vmul.f32 %v532, %v549
        %v554 = vadd.f32 %v526, %v550
        %v555 = vadd.f32 %v527, %v551
        %v556 = vadd.f32 %v528, %v552
        %v557 = vadd.f32 %v529, %v553
        %558 = vset.pattern.permute.xlu0 6
        %559 = vperm.xlu0 %558, %v178
        %v560 = vpop.permute.xlu0 %559
        %v562 = vlaneseq
        %v563 = vshrl.u32 %v562, 7
        %v564 = vsub.s32 6, %v563
        %v565 = vrot.slane %v381, %v564
        %v566 = vlaneseq
        %v567 = vshrl.u32 %v566, 7
        %v568 = vsub.s32 6, %v567
        %v569 = vrot.slane %v382, %v568
        %v570 = vlaneseq
        %v571 = vshrl.u32 %v570, 7
        %v572 = vsub.s32 6, %v571
        %v573 = vrot.slane %v383, %v572
        %v574 = vlaneseq
        %v575 = vshrl.u32 %v574, 7
        %v576 = vsub.s32 6, %v575
        %v577 = vrot.slane %v384, %v576
        %v578 = vmul.f32 %v560, %v565
        %v579 = vmul.f32 %v560, %v569
        %v580 = vmul.f32 %v560, %v573
        %v581 = vmul.f32 %v560, %v577
        %v582 = vadd.f32 %v554, %v578
        %v583 = vadd.f32 %v555, %v579
        %v584 = vadd.f32 %v556, %v580
        %v585 = vadd.f32 %v557, %v581
        %586 = vset.pattern.permute.xlu0 7
        %587 = vperm.xlu0 %586, %v178
        %v588 = vpop.permute.xlu0 %587
        %v590 = vlaneseq
        %v591 = vshrl.u32 %v590, 7
        %v592 = vsub.s32 7, %v591
        %v593 = vrot.slane %v381, %v592
        %v594 = vlaneseq
        %v595 = vshrl.u32 %v594, 7
        %v596 = vsub.s32 7, %v595
        %v597 = vrot.slane %v382, %v596
        %v598 = vlaneseq
        %v599 = vshrl.u32 %v598, 7
        %v600 = vsub.s32 7, %v599
        %v601 = vrot.slane %v383, %v600
        %v602 = vlaneseq
        %v603 = vshrl.u32 %v602, 7
        %v604 = vsub.s32 7, %v603
        %v605 = vrot.slane %v384, %v604
        %v606 = vmul.f32 %v588, %v593
        %v607 = vmul.f32 %v588, %v597
        %v608 = vmul.f32 %v588, %v601
        %v609 = vmul.f32 %v588, %v605
        %v610 = vadd.f32 %v582, %v606
        %v611 = vadd.f32 %v583, %v607
        %v612 = vadd.f32 %v584, %v608
        %v613 = vadd.f32 %v585, %v609
        %v614 = vmax.f32 %v610, 0.0
        %v615 = vmax.f32 %v611, 0.0
        %v616 = vmax.f32 %v612, 0.0
        %v617 = vmax.f32 %v613, 0.0
        %619 = vset.pattern.permute.xlu0 8
        %620 = vperm.xlu0 %619, %v179
        %v621 = vpop.permute.xlu0 %620
        %623 = vset.pattern.permute.xlu0 0
        %624 = vperm.xlu0 %623, %v179
        %v625 = vpop.permute.xlu0 %624
        %v627 = vlaneseq
        %v628 = vshrl.u32 %v627, 7
        %v629 = vsub.s32 0, %v628
        %v630 = vrot.slane %v614, %v629
        %v631 = vlaneseq
        %v632 = vshrl.u32 %v631, 7
        %v633 = vsub.s32 0, %v632
        %v634 = vrot.slane %v615, %v633
        %v635 = vlaneseq
        %v636 = vshrl.u32 %v635, 7
        %v637 = vsub.s32 0, %v636
        %v638 = vrot.slane %v616, %v637
        %v639 = vlaneseq
        %v640 = vshrl.u32 %v639, 7
        %v641 = vsub.s32 0, %v640
        %v642 = vrot.slane %v617, %v641
        %v643 = vmul.f32 %v625, %v630
        %v644 = vmul.f32 %v625, %v634
        %v645 = vmul.f32 %v625, %v638
        %v646 = vmul.f32 %v625, %v642
        %v647 = vadd.f32 %v621, %v643
        %v648 = vadd.f32 %v621, %v644
        %v649 = vadd.f32 %v621, %v645
        %v650 = vadd.f32 %v621, %v646
        %651 = vset.pattern.permute.xlu0 1
        %652 = vperm.xlu0 %651, %v179
        %v653 = vpop.permute.xlu0 %652
        %v655 = vlaneseq
        %v656 = vshrl.u32 %v655, 7
        %v657 = vsub.s32 1, %v656
        %v658 = vrot.slane %v614, %v657
        %v659 = vlaneseq
        %v660 = vshrl.u32 %v659, 7
        %v661 = vsub.s32 1, %v660
        %v662 = vrot.slane %v615, %v661
        %v663 = vlaneseq
        %v664 = vshrl.u32 %v663, 7
        %v665 = vsub.s32 1, %v664
        %v666 = vrot.slane %v616, %v665
        %v667 = vlaneseq
        %v668 = vshrl.u32 %v667, 7
        %v669 = vsub.s32 1, %v668
        %v670 = vrot.slane %v617, %v669
        %v671 = vmul.f32 %v653, %v658
        %v672 = vmul.f32 %v653, %v662
        %v673 = vmul.f32 %v653, %v666
        %v674 = vmul.f32 %v653, %v670
        %v675 = vadd.f32 %v647, %v671
        %v676 = vadd.f32 %v648, %v672
        %v677 = vadd.f32 %v649, %v673
        %v678 = vadd.f32 %v650, %v674
        %679 = vset.pattern.permute.xlu0 2
        %680 = vperm.xlu0 %679, %v179
        %v681 = vpop.permute.xlu0 %680
        %v683 = vlaneseq
        %v684 = vshrl.u32 %v683, 7
        %v685 = vsub.s32 2, %v684
        %v686 = vrot.slane %v614, %v685
        %v687 = vlaneseq
        %v688 = vshrl.u32 %v687, 7
        %v689 = vsub.s32 2, %v688
        %v690 = vrot.slane %v615, %v689
        %v691 = vlaneseq
        %v692 = vshrl.u32 %v691, 7
        %v693 = vsub.s32 2, %v692
        %v694 = vrot.slane %v616, %v693
        %v695 = vlaneseq
        %v696 = vshrl.u32 %v695, 7
        %v697 = vsub.s32 2, %v696
        %v698 = vrot.slane %v617, %v697
        %v699 = vmul.f32 %v681, %v686
        %v700 = vmul.f32 %v681, %v690
        %v701 = vmul.f32 %v681, %v694
        %v702 = vmul.f32 %v681, %v698
        %v703 = vadd.f32 %v675, %v699
        %v704 = vadd.f32 %v676, %v700
        %v705 = vadd.f32 %v677, %v701
        %v706 = vadd.f32 %v678, %v702
        %707 = vset.pattern.permute.xlu0 3
        %708 = vperm.xlu0 %707, %v179
        %v709 = vpop.permute.xlu0 %708
        %v711 = vlaneseq
        %v712 = vshrl.u32 %v711, 7
        %v713 = vsub.s32 3, %v712
        %v714 = vrot.slane %v614, %v713
        %v715 = vlaneseq
        %v716 = vshrl.u32 %v715, 7
        %v717 = vsub.s32 3, %v716
        %v718 = vrot.slane %v615, %v717
        %v719 = vlaneseq
        %v720 = vshrl.u32 %v719, 7
        %v721 = vsub.s32 3, %v720
        %v722 = vrot.slane %v616, %v721
        %v723 = vlaneseq
        %v724 = vshrl.u32 %v723, 7
        %v725 = vsub.s32 3, %v724
        %v726 = vrot.slane %v617, %v725
        %v727 = vmul.f32 %v709, %v714
        %v728 = vmul.f32 %v709, %v718
        %v729 = vmul.f32 %v709, %v722
        %v730 = vmul.f32 %v709, %v726
        %v731 = vadd.f32 %v703, %v727
        %v732 = vadd.f32 %v704, %v728
        %v733 = vadd.f32 %v705, %v729
        %v734 = vadd.f32 %v706, %v730
        %735 = vset.pattern.permute.xlu0 4
        %736 = vperm.xlu0 %735, %v179
        %v737 = vpop.permute.xlu0 %736
        %v739 = vlaneseq
        %v740 = vshrl.u32 %v739, 7
        %v741 = vsub.s32 4, %v740
        %v742 = vrot.slane %v614, %v741
        %v743 = vlaneseq
        %v744 = vshrl.u32 %v743, 7
        %v745 = vsub.s32 4, %v744
        %v746 = vrot.slane %v615, %v745
        %v747 = vlaneseq
        %v748 = vshrl.u32 %v747, 7
        %v749 = vsub.s32 4, %v748
        %v750 = vrot.slane %v616, %v749
        %v751 = vlaneseq
        %v752 = vshrl.u32 %v751, 7
        %v753 = vsub.s32 4, %v752
        %v754 = vrot.slane %v617, %v753
        %v755 = vmul.f32 %v737, %v742
        %v756 = vmul.f32 %v737, %v746
        %v757 = vmul.f32 %v737, %v750
        %v758 = vmul.f32 %v737, %v754
        %v759 = vadd.f32 %v731, %v755
        %v760 = vadd.f32 %v732, %v756
        %v761 = vadd.f32 %v733, %v757
        %v762 = vadd.f32 %v734, %v758
        %763 = vset.pattern.permute.xlu0 5
        %764 = vperm.xlu0 %763, %v179
        %v765 = vpop.permute.xlu0 %764
        %v767 = vlaneseq
        %v768 = vshrl.u32 %v767, 7
        %v769 = vsub.s32 5, %v768
        %v770 = vrot.slane %v614, %v769
        %v771 = vlaneseq
        %v772 = vshrl.u32 %v771, 7
        %v773 = vsub.s32 5, %v772
        %v774 = vrot.slane %v615, %v773
        %v775 = vlaneseq
        %v776 = vshrl.u32 %v775, 7
        %v777 = vsub.s32 5, %v776
        %v778 = vrot.slane %v616, %v777
        %v779 = vlaneseq
        %v780 = vshrl.u32 %v779, 7
        %v781 = vsub.s32 5, %v780
        %v782 = vrot.slane %v617, %v781
        %v783 = vmul.f32 %v765, %v770
        %v784 = vmul.f32 %v765, %v774
        %v785 = vmul.f32 %v765, %v778
        %v786 = vmul.f32 %v765, %v782
        %v787 = vadd.f32 %v759, %v783
        %v788 = vadd.f32 %v760, %v784
        %v789 = vadd.f32 %v761, %v785
        %v790 = vadd.f32 %v762, %v786
        %791 = vset.pattern.permute.xlu0 6
        %792 = vperm.xlu0 %791, %v179
        %v793 = vpop.permute.xlu0 %792
        %v795 = vlaneseq
        %v796 = vshrl.u32 %v795, 7
        %v797 = vsub.s32 6, %v796
        %v798 = vrot.slane %v614, %v797
        %v799 = vlaneseq
        %v800 = vshrl.u32 %v799, 7
        %v801 = vsub.s32 6, %v800
        %v802 = vrot.slane %v615, %v801
        %v803 = vlaneseq
        %v804 = vshrl.u32 %v803, 7
        %v805 = vsub.s32 6, %v804
        %v806 = vrot.slane %v616, %v805
        %v807 = vlaneseq
        %v808 = vshrl.u32 %v807, 7
        %v809 = vsub.s32 6, %v808
        %v810 = vrot.slane %v617, %v809
        %v811 = vmul.f32 %v793, %v798
        %v812 = vmul.f32 %v793, %v802
        %v813 = vmul.f32 %v793, %v806
        %v814 = vmul.f32 %v793, %v810
        %v815 = vadd.f32 %v787, %v811
        %v816 = vadd.f32 %v788, %v812
        %v817 = vadd.f32 %v789, %v813
        %v818 = vadd.f32 %v790, %v814
        %819 = vset.pattern.permute.xlu0 7
        %820 = vperm.xlu0 %819, %v179
        %v821 = vpop.permute.xlu0 %820
        %v823 = vlaneseq
        %v824 = vshrl.u32 %v823, 7
        %v825 = vsub.s32 7, %v824
        %v826 = vrot.slane %v614, %v825
        %v827 = vlaneseq
        %v828 = vshrl.u32 %v827, 7
        %v829 = vsub.s32 7, %v828
        %v830 = vrot.slane %v615, %v829
        %v831 = vlaneseq
        %v832 = vshrl.u32 %v831, 7
        %v833 = vsub.s32 7, %v832
        %v834 = vrot.slane %v616, %v833
        %v835 = vlaneseq
        %v836 = vshrl.u32 %v835, 7
        %v837 = vsub.s32 7, %v836
        %v838 = vrot.slane %v617, %v837
        %v839 = vmul.f32 %v821, %v826
        %v840 = vmul.f32 %v821, %v830
        %v841 = vmul.f32 %v821, %v834
        %v842 = vmul.f32 %v821, %v838
        %v843 = vadd.f32 %v815, %v839
        %v844 = vadd.f32 %v816, %v840
        %v845 = vadd.f32 %v817, %v841
        %v846 = vadd.f32 %v818, %v842
        %v851 = vcombine.low %v843, %v844
        %v852 = vcombine.low %v845, %v846
        %v854 = vunpack.c.l.s4 1983009808
        %v855 = vunpack.c.0.s8 %v854
        %v856 = vlaneseq
        %v857 = vshrl.u32 %v856, 7
        %v858 = vsub.s32 %v855, %v857
        %v859 = vrot.slane %v851, %v858
        %v861 = vunpack.c.l.s4 1983009808
        %v862 = vunpack.c.0.s8 %v861
        %v863 = vlaneseq
        %v864 = vshrl.u32 %v863, 7
        %v865 = vsub.s32 %v862, %v864
        %v866 = vrot.slane %v852, %v865
        %v867 = vcombine.low %v859, %v866
        %869 = vst [vmem:[%s174] sm:$0xff] %v867
        %s870 = sand.u32 %s75, 1
        %s871 = scalar_lea.sflag [#allocation4], %s870
        %s872 = sand.u32 %s75, 1
        %s873 = smul.addr %s872, 8
        %s874 = scalar_lea.vmem [#allocation7], %s873
        // Predicated region
        $region37: #{tpu_custom_call.1} parent=27 // pred_check
          %p875 = pneg %p85
        $region38: #{tpu_custom_call.1} parent=27 // pred_check_branch
          %877 = sbr.rel (%p875) target = $region40
        $region39: #{tpu_custom_call.1} parent=27 // pred_region
          %s878 = smul.u32 4, %s20
          %s880 = ssub.s32 128, 128
          %881 = vsyncadd %s871, %s880
          %s882 = smul.addr %s878, 32
          %s883 = scalar_lea.hbm %s2, %s882
          %s885 = sshll.u32 %s874, 4
          %s886 = int_to_ptr.vmem [resolvable:$true] %s885
          %888 = dma.vmem_to_hbm [thread:$0]  %s886, 128, %s883, %s871
        $region40: #{tpu_custom_call.1} parent=27 // pred_fallthru
          _
      $region28: #{tpu_custom_call.1} parent=5 // pred_fallthru
        _
      %p889 = scmp.le.s32.totalorder 2, %s15
      // Predicated region
      $region41: #{tpu_custom_call.1} parent=5 // pred_check
        %p890 = pneg %p889
      $region42: #{tpu_custom_call.1} parent=5 // pred_check_branch
        %892 = sbr.rel (%p890) target = $region44
      $region43: #{tpu_custom_call.1} parent=5 // pred_region
        %s893 = ssub.s32 %s15, 2
        // Predicated region
        $region45: #{tpu_custom_call.1} parent=43 // pred_check
          %p894 = pneg %p91
        $region46: #{tpu_custom_call.1} parent=43 // pred_check_branch
          %896 = sbr.rel (%p894) target = $region48
        $region47: #{tpu_custom_call.1} parent=43 // pred_region
          %s897 = sand.u32 %s76, 1
          %s898 = scalar_lea.sflag [#allocation4], %s897
          %s899 = sand.u32 %s76, 1
          %s900 = smul.addr %s899, 8
          %s901 = scalar_lea.vmem [#allocation7], %s900
          %902 = dma.done %s898, 128
        $region48: #{tpu_custom_call.1} parent=43 // pred_fallthru
          _
      $region44: #{tpu_custom_call.1} parent=5 // pred_fallthru
        _
    $region6: #{tpu_custom_call.1} parent=1 // loop_footer
      %s19 = sadd.s32 1, %s15
    $region7: #{tpu_custom_call.1} parent=1 // loop_footer_branch
      %14 = sbr.rel target = $region3
    $region8: #{tpu_custom_call.1} parent=1 // loop_exit
      _
    %903 = vsyncpa [#allocation3], 1
    %s904 = scalar_lea.sflag [#allocation3], 1
    %905 = vsyncpa %s904, 1
    %906 = vsyncpa [#allocation6], 1
    %s907 = scalar_lea.sflag [#allocation6], 1
    %908 = vsyncpa %s907, 1
    %909 = vsyncpa [#allocation4], 1
    %s910 = scalar_lea.sflag [#allocation4], 1
    %911 = vsyncpa %s910, 1

</llo_original>
